<compile_context>
chip_gen: v7x
topology: tpu7x:2x2x1
jax: 0.10.0
libtpu: 0.0.40
codegen_flags: <defaults>
</compile_context>

<pallas_src>
import functools

import jax
import jax.numpy as jnp
from jax import lax
from jax.experimental import pallas as pl
from jax.experimental.pallas import tpu as pltpu

_MIB = 1024 * 1024


def _vmem_caps():
    """Per-generation (tile-sizing budget, scoped vmem_limit cap) in bytes."""
    try:
        phys = int(pltpu.get_tpu_info().vmem_capacity_bytes)
    except Exception:
        phys = 64 * _MIB          # conservative fallback == v7x per-TensorCore VMEM
    budget = int(phys * 0.45)     # bytes we aim to occupy with (double-buffered) tiles
    cap = int(phys * 0.70)        # upper bound for vmem_limit_bytes (leave compiler slack)
    return budget, cap


# ----------------------------------------------------------------------------
# Kernel 1: fused projection + per-node attention logits (row-tiled over N)
# ----------------------------------------------------------------------------
def _proj_kernel(h_ref, w_ref, al_ref, ar_ref, feat_ref, el_ref, er_ref, *, mm_dtype):
    feat32 = jnp.dot(h_ref[...].astype(mm_dtype), w_ref[...].astype(mm_dtype),
                     preferred_element_type=jnp.float32)          # (tp, F_out)
    feat_ref[...] = feat32.astype(feat_ref.dtype)                 # bf16 on the fast path
    # Attention logits hoisted out of the attention kernel: one small MXU matmul each.
    el_ref[...] = jnp.dot(feat32, al_ref[...], preferred_element_type=jnp.float32)
    er_ref[...] = jnp.dot(feat32, ar_ref[...], preferred_element_type=jnp.float32)


# ----------------------------------------------------------------------------
# Kernel 2: masked-softmax attention + aggregation for one tile of dst rows
# ----------------------------------------------------------------------------
def _attn_kernel(adj_ref, fsrc_ref, elt_ref, er_ref, out_ref, *,
                 num_heads, head_dim, approx):
    adj = adj_ref[...].astype(jnp.float32)          # (T, N_src) exact 0/1 from int8
    bias = (adj - 1.0) * 1e30                       # additive mask, shared by all heads

    for hd in range(num_heads):                     # static unroll over heads
        sl = pl.ds(hd * head_dim, head_dim)
        el_row = elt_ref[hd:hd + 1, :]              # (1, N_src) source logits
        er_col = er_ref[:, hd:hd + 1]               # (T, 1)     destination logits
        s = er_col + el_row                         # (T, N_src)
        e = jnp.maximum(s, 0.2 * s) + bias          # LeakyReLU(0.2) + mask (mul+max, 1 add)
        m = jnp.max(e, axis=1, keepdims=True)
        p = jnp.exp(e - m)                          # exactly 0 on masked edges (>=1 in-edge)
        denom = jnp.sum(p, axis=1, keepdims=True)
        acc = jnp.dot(p.astype(fsrc_ref.dtype), fsrc_ref[:, sl],
                      preferred_element_type=jnp.float32)         # (T, D) on the MXU
        # Normalize AFTER the matmul: (T, D) multiply instead of (T, N_src); 1/denom on EUP.
        out_ref[:, sl] = acc * pl.reciprocal(denom, approx=approx)


# ----------------------------------------------------------------------------
# Kernel 3a: BatchNorm batch statistics (row-tiled sum / sum-of-squares reduction)
# ----------------------------------------------------------------------------
def _bn_stats_kernel(y_ref, s1_ref, s2_ref):
    @pl.when(pl.program_id(0) == 0)
    def _():
        s1_ref[...] = jnp.zeros_like(s1_ref)
        s2_ref[...] = jnp.zeros_like(s2_ref)
    y = y_ref[...]
    s1_ref[...] += jnp.sum(y, axis=0, keepdims=True)
    s2_ref[...] += jnp.sum(y * y, axis=0, keepdims=True)


# ----------------------------------------------------------------------------
# Kernel 3b: fused BN scale/shift + ELU + residual (row-tiled)
# ----------------------------------------------------------------------------
def _post_kernel(*refs, do_bn, do_res):
    out_ref = refs[-1]
    y = refs[0][...]                                # (tr, F_out)
    idx = 1
    if do_bn:
        y = y * refs[idx][...] + refs[idx + 1][...]   # precomputed scale / shift
        idx += 2
    # ELU(alpha=1): clamp exp argument so the untaken branch stays finite.
    y = jnp.where(y > 0, y, jnp.exp(jnp.minimum(y, 0.0)) - 1.0)
    if do_res:
        y = y + refs[idx][...]
    out_ref[...] = y


# ----------------------------------------------------------------------------
# Tile choosers
# ----------------------------------------------------------------------------
def _row_tile(n, max_tile):
    t = max(1, min(n, max_tile))
    if t >= 8:
        t = (t // 8) * 8
        while t > 8 and n % t != 0:
            t -= 8
    if n % t != 0:
        t = n
    return t


def _dst_tile(n_dst, n_src, f_out, heads, feat_bytes, budget, max_tile=1024):
    # Resident (double-buffered) blocks: feat_src + transposed source logits.
    resident = 2 * n_src * f_out * feat_bytes + 2 * heads * n_src * 4
    # Per-dst-row (double-buffered): adj int8 + er f32 + out f32.
    per_row = 2 * n_src + 2 * heads * 4 + 2 * f_out * 4
    avail = max(budget - resident, per_row * 32)
    t = min(n_dst, max_tile, max(32, int(avail // per_row)))
    if t >= 32:
        t = (t // 32) * 32                     # int8 sublane tiling wants multiples of 32
        while t > 32 and n_dst % t != 0:
            t -= 32
    if n_dst % t != 0:
        t = n_dst                              # always layout-legal fallback (small N)
    return t


# ----------------------------------------------------------------------------
# Wrapper
# ----------------------------------------------------------------------------
def gat_layer_forward(h, adj, W, attn_l, attn_r, gamma=None, beta=None, *,
                      batch_norm=True, residual=True, eps=1e-5,
                      matmul_dtype=jnp.bfloat16, approx_recip=True, dst_tile=None):
    N, in_dim = h.shape
    H, _, D = W.shape
    F_out = H * D
    residual = bool(residual) and (in_dim == F_out)      # mirrors the PyTorch module

    budget, cap = _vmem_caps()
    feat_dtype = jnp.bfloat16 if jnp.dtype(matmul_dtype) == jnp.dtype(jnp.bfloat16) \
        else jnp.float32
    fb = 2 if feat_dtype == jnp.bfloat16 else 4

    h = h.astype(jnp.float32)
    # Lane-dense flattening: feat[:, hd*D + d] corresponds to head hd, channel d.
    w_flat = jnp.transpose(W, (1, 0, 2)).reshape(in_dim, F_out).astype(jnp.float32)
    # Block-diagonal attention projections so el/er come out of one MXU matmul each:
    # AL[hd*D + d, hd] = attn_l[hd, 0, d].
    eye_h = jnp.eye(H, dtype=jnp.float32)
    AL = (attn_l[:, 0, :, None].astype(jnp.float32) * eye_h[:, None, :]).reshape(F_out, H)
    AR = (attn_r[:, 0, :, None].astype(jnp.float32) * eye_h[:, None, :]).reshape(F_out, H)
    adj_i8 = adj.astype(jnp.int8)                        # exact 0/1, quarter of f32 traffic

    # ---- Kernel 1: projection + logits (row-tiled over N) ----
    per_row1 = 2 * in_dim * 4 + 2 * F_out * fb + 4 * H * 4
    res1 = 2 * in_dim * F_out * 4 + 4 * F_out * H * 4
    tp_cap = max(8, (budget - res1) // max(per_row1, 1))
    tp = _row_tile(N, min(2048, tp_cap))
    vmem1 = int(min(cap, max(2 * (res1 + tp * per_row1), 8 * _MIB)))

    feat, el, er = pl.pallas_call(
        functools.partial(_proj_kernel, mm_dtype=matmul_dtype),
        out_shape=(jax.ShapeDtypeStruct((N, F_out), feat_dtype),
                   jax.ShapeDtypeStruct((N, H), jnp.float32),
                   jax.ShapeDtypeStruct((N, H), jnp.float32)),
        grid_spec=pltpu.PrefetchScalarGridSpec(
            num_scalar_prefetch=0,
            grid=(N // tp,),
            in_specs=[pl.BlockSpec((tp, in_dim), lambda i: (i, 0)),
                      pl.BlockSpec((in_dim, F_out), lambda i: (0, 0)),
                      pl.BlockSpec((F_out, H), lambda i: (0, 0)),
                      pl.BlockSpec((F_out, H), lambda i: (0, 0))],
            out_specs=[pl.BlockSpec((tp, F_out), lambda i: (i, 0)),
                       pl.BlockSpec((tp, H), lambda i: (i, 0)),
                       pl.BlockSpec((tp, H), lambda i: (i, 0))]),
        compiler_params=pltpu.CompilerParams(
            dimension_semantics=("parallel",), vmem_limit_bytes=vmem1),
    )(h, w_flat, AL, AR)

    # Tiny (N, H) -> (H, N) transpose so kernel 2 can read lane-dense source-logit rows.
    el_t = jnp.transpose(el)

    # ---- Kernel 2: attention + aggregation, grid over dst-row tiles ----
    T = dst_tile if dst_tile is not None else _dst_tile(N, N, F_out, H, fb, budget)
    est2 = (2 * N * F_out * fb + 2 * H * N * 4
            + T * (2 * N + 2 * H * 4 + 2 * F_out * 4))
    vmem2 = int(min(cap, max(int(1.5 * est2), 16 * _MIB)))

    gat_out = pl.pallas_call(
        functools.partial(_attn_kernel, num_heads=H, head_dim=D, approx=approx_recip),
        out_shape=jax.ShapeDtypeStruct((N, F_out), jnp.float32),
        grid_spec=pltpu.PrefetchScalarGridSpec(
            num_scalar_prefetch=0,
            grid=(N // T,),
            in_specs=[
                pl.BlockSpec((T, N), lambda j: (j, 0)),        # adjacency rows (int8)
                pl.BlockSpec((N, F_out), lambda j: (0, 0)),    # resident projected features
                pl.BlockSpec((H, N), lambda j: (0, 0)),        # resident source logits
                pl.BlockSpec((T, H), lambda j: (j, 0)),        # destination logits for tile
            ],
            out_specs=pl.BlockSpec((T, F_out), lambda j: (j, 0))),
        compiler_params=pltpu.CompilerParams(
            dimension_semantics=("parallel",), vmem_limit_bytes=vmem2),
    )(adj_i8, feat, el_t, er)

    # ---- Kernel 3: BN (batch stats) + ELU + residual, row-tiled ----
    n_big = 2 + (1 if residual else 0)
    per_row3 = 2 * n_big * F_out * 4
    tr = _row_tile(N, max(8, min(4096, budget // max(per_row3, 1))))
    vmem3 = int(min(cap, max(2 * (tr * per_row3 + 8 * F_out * 4), 8 * _MIB)))

    scale = shift = None
    if batch_norm:
        s1, s2 = pl.pallas_call(
            _bn_stats_kernel,
            out_shape=(jax.ShapeDtypeStruct((1, F_out), jnp.float32),
                       jax.ShapeDtypeStruct((1, F_out), jnp.float32)),
            grid_spec=pltpu.PrefetchScalarGridSpec(
                num_scalar_prefetch=0,
                grid=(N // tr,),
                in_specs=[pl.BlockSpec((tr, F_out), lambda i: (i, 0))],
                out_specs=[pl.BlockSpec((1, F_out), lambda i: (0, 0)),
                           pl.BlockSpec((1, F_out), lambda i: (0, 0))]),
            compiler_params=pltpu.CompilerParams(
                dimension_semantics=("arbitrary",), vmem_limit_bytes=vmem3),
        )(gat_out)
        mean = s1 / N
        var = jnp.maximum(s2 / N - mean * mean, 0.0)
        inv = lax.rsqrt(var + eps)
        scale = jnp.reshape(gamma, (1, F_out)).astype(jnp.float32) * inv
        shift = jnp.reshape(beta, (1, F_out)).astype(jnp.float32) - mean * scale

    inputs = [gat_out]
    in_specs = [pl.BlockSpec((tr, F_out), lambda i: (i, 0))]
    if batch_norm:
        inputs += [scale, shift]
        in_specs += [pl.BlockSpec((1, F_out), lambda i: (0, 0)),
                     pl.BlockSpec((1, F_out), lambda i: (0, 0))]
    if residual:
        inputs += [h]
        in_specs += [pl.BlockSpec((tr, F_out), lambda i: (i, 0))]

    out = pl.pallas_call(
        functools.partial(_post_kernel, do_bn=batch_norm, do_res=residual),
        out_shape=jax.ShapeDtypeStruct((N, F_out), jnp.float32),
        grid_spec=pltpu.PrefetchScalarGridSpec(
            num_scalar_prefetch=0,
            grid=(N // tr,),
            in_specs=in_specs,
            out_specs=pl.BlockSpec((tr, F_out), lambda i: (i, 0))),
        compiler_params=pltpu.CompilerParams(
            dimension_semantics=("parallel",), vmem_limit_bytes=vmem3),
    )(*inputs)
    return out


# ----------------------------------------------------------------------------
# Pure-JAX reference (mirrors DGL GATConv + BN + ELU + residual)
# ----------------------------------------------------------------------------
def gat_layer_reference(h, adj, W, attn_l, attn_r, gamma, beta, *,
                        batch_norm=True, residual=True, eps=1e-5):
    N, in_dim = h.shape
    H, _, D = W.shape
    feat = jnp.einsum('ni,hid->nhd', h, W)                       # (N, H, D)
    el = jnp.sum(feat * attn_l[:, 0, :][None], axis=-1)          # (N, H) src
    er = jnp.sum(feat * attn_r[:, 0, :][None], axis=-1)          # (N, H) dst
    e = er[:, None, :] + el[None, :, :]                          # (N_dst, N_src, H)
    e = jnp.where(e > 0, e, 0.2 * e)
    mask = (adj > 0)[:, :, None]
    e = jnp.where(mask, e, -1e30)
    m = jnp.max(e, axis=1, keepdims=True)
    p = jnp.where(mask, jnp.exp(e - m), 0.0)
    alpha = p / jnp.sum(p, axis=1, keepdims=True)
    y = jnp.einsum('vuh,uhd->vhd', alpha, feat).reshape(N, H * D)
    if batch_norm:
        mean = jnp.mean(y, axis=0, keepdims=True)
        var = jnp.mean((y - mean) ** 2, axis=0, keepdims=True)
        y = (y - mean) / jnp.sqrt(var + eps) * gamma + beta
    y = jnp.where(y > 0, y, jnp.exp(jnp.minimum(y, 0.0)) - 1.0)
    if residual and in_dim == H * D:
        y = y + h
    return y


if __name__ == "__main__":
    N, in_dim, num_heads, out_dim = 64, 32, 4, 8   # in_dim == num_heads*out_dim -> residual ok
    key = jax.random.PRNGKey(0)
    k_h, k_adj, k_w, k_al, k_ar, k_g, k_b = jax.random.split(key, 7)

    h = jax.random.normal(k_h, (N, in_dim), jnp.float32)

    # Random sparse adjacency with self-loops (adj[v, u] = edge u -> v); self-loops guarantee
    # every destination has at least one incoming edge (softmax denominator > 0).
    adj = jax.random.bernoulli(k_adj, 0.2, (N, N)).astype(jnp.float32)
    adj = jnp.maximum(adj, jnp.eye(N, dtype=jnp.float32))

    W = jax.random.normal(k_w, (num_heads, in_dim, out_dim), jnp.float32) * 0.1
    attn_l = jax.random.normal(k_al, (num_heads, 1, out_dim), jnp.float32) * 0.1
    attn_r = jax.random.normal(k_ar, (num_heads, 1, out_dim), jnp.float32) * 0.1
    gamma = jax.random.normal(k_g, (1, num_heads * out_dim), jnp.float32) * 0.1 + 1.0
    beta = jax.random.normal(k_b, (1, num_heads * out_dim), jnp.float32) * 0.1

    ref = gat_layer_reference(h, adj, W, attn_l, attn_r, gamma, beta,
                              batch_norm=True, residual=True)

    # Precise path (f32 MXU operands, exact reciprocal): tight check vs reference.
    out_precise = gat_layer_forward(h, adj, W, attn_l, attn_r, gamma, beta,
                                    batch_norm=True, residual=True,
                                    matmul_dtype=jnp.float32, approx_recip=False)
    out_precise = jax.block_until_ready(out_precise)
    assert out_precise.shape == (N, num_heads * out_dim)
    assert jnp.allclose(out_precise, ref, atol=1e-4, rtol=1e-4), "precise path mismatch"

    # Fast path (default: bf16 MXU operands + bf16 resident feat, int8 adjacency,
    # EUP approx reciprocal).
    out_fast = gat_layer_forward(h, adj, W, attn_l, attn_r, gamma, beta,
                                 batch_norm=True, residual=True)
    out_fast = jax.block_until_ready(out_fast)
    assert bool(jnp.all(jnp.isfinite(out_fast)))
    assert jnp.allclose(out_fast, ref, atol=1e-1, rtol=1e-1), "fast path mismatch"

    # Activation-only path (no BN, no residual, no extra DMA'd inputs).
    out_plain = gat_layer_forward(h, adj, W, attn_l, attn_r, None, None,
                                  batch_norm=False, residual=False,
                                  matmul_dtype=jnp.float32, approx_recip=False)
    out_plain = jax.block_until_ready(out_plain)
    ref_plain = gat_layer_reference(h, adj, W, attn_l, attn_r, gamma, beta,
                                    batch_norm=False, residual=False)
    assert jnp.allclose(out_plain, ref_plain, atol=1e-4, rtol=1e-4), "plain path mismatch"

    print("KERNEL_OK")
</pallas_src>

<mosaic_0001>
module attributes {stable_mosaic.version = 11 : i64} {
  func.func @_proj_kernel(%arg0: i32, %arg1: memref<64x32xf32, #tpu.memory_space<vmem>>, %arg2: memref<32x32xf32, #tpu.memory_space<vmem>>, %arg3: memref<32x4xf32, #tpu.memory_space<vmem>>, %arg4: memref<32x4xf32, #tpu.memory_space<vmem>>, %arg5: memref<64x32xf32, #tpu.memory_space<vmem>>, %arg6: memref<64x4xf32, #tpu.memory_space<vmem>>, %arg7: memref<64x4xf32, #tpu.memory_space<vmem>>) attributes {dimension_semantics = [#tpu.dimension_semantics<parallel>], iteration_bounds = array<i64: 1>, scalar_prefetch = 0 : i64, scratch_operands = 0 : i64, tpu.core_type = #tpu.core_type<tc>, window_params = [{transform_indices = @transform_0, window_bounds = array<i64: 64, 32>}, {pipeline_mode = #tpu.pipeline_mode<synchronous>, transform_indices = @transform_1, window_bounds = array<i64: 32, 32>}, {pipeline_mode = #tpu.pipeline_mode<synchronous>, transform_indices = @transform_2, window_bounds = array<i64: 32, 4>}, {pipeline_mode = #tpu.pipeline_mode<synchronous>, transform_indices = @transform_3, window_bounds = array<i64: 32, 4>}, {transform_indices = @transform_4, window_bounds = array<i64: 64, 32>}, {transform_indices = @transform_5, window_bounds = array<i64: 64, 4>}, {transform_indices = @transform_6, window_bounds = array<i64: 64, 4>}]} {
    %c0 = arith.constant 0 : index
    %c0_0 = arith.constant 0 : index
    %0 = vector.load %arg1[%c0, %c0_0] : memref<64x32xf32, #tpu.memory_space<vmem>>, vector<64x32xf32>
    %c0_1 = arith.constant 0 : index
    %c0_2 = arith.constant 0 : index
    %1 = vector.load %arg2[%c0_1, %c0_2] : memref<32x32xf32, #tpu.memory_space<vmem>>, vector<32x32xf32>
    %cst = arith.constant dense<0.000000e+00> : vector<64x32xf32>
    %2 = tpu.matmul %0, %1, %cst {dimension_numbers = #tpu.dot_dimension_numbers<[1], [0], [0], [1], [0, 0, 1, 1], [], []>} : vector<64x32xf32>, vector<32x32xf32>, vector<64x32xf32> -> vector<64x32xf32>
    %c0_3 = arith.constant 0 : index
    %c0_4 = arith.constant 0 : index
    %3 = vector.load %arg5[%c0_3, %c0_4] : memref<64x32xf32, #tpu.memory_space<vmem>>, vector<64x32xf32>
    tpu.vector_store %arg5[%c0_3, %c0_4], %2 {strides = array<i32>} : memref<64x32xf32, #tpu.memory_space<vmem>>, vector<64x32xf32>,
    %c0_5 = arith.constant 0 : index
    %c0_6 = arith.constant 0 : index
    %4 = vector.load %arg3[%c0_5, %c0_6] : memref<32x4xf32, #tpu.memory_space<vmem>>, vector<32x4xf32>
    %cst_7 = arith.constant dense<0.000000e+00> : vector<64x4xf32>
    %5 = tpu.matmul %2, %4, %cst_7 {dimension_numbers = #tpu.dot_dimension_numbers<[1], [0], [0], [1], [0, 0, 1, 1], [], []>} : vector<64x32xf32>, vector<32x4xf32>, vector<64x4xf32> -> vector<64x4xf32>
    %c0_8 = arith.constant 0 : index
    %c0_9 = arith.constant 0 : index
    %6 = vector.load %arg6[%c0_8, %c0_9] : memref<64x4xf32, #tpu.memory_space<vmem>>, vector<64x4xf32>
    tpu.vector_store %arg6[%c0_8, %c0_9], %5 {strides = array<i32>} : memref<64x4xf32, #tpu.memory_space<vmem>>, vector<64x4xf32>,
    %c0_10 = arith.constant 0 : index
    %c0_11 = arith.constant 0 : index
    %7 = vector.load %arg4[%c0_10, %c0_11] : memref<32x4xf32, #tpu.memory_space<vmem>>, vector<32x4xf32>
    %cst_12 = arith.constant dense<0.000000e+00> : vector<64x4xf32>
    %8 = tpu.matmul %2, %7, %cst_12 {dimension_numbers = #tpu.dot_dimension_numbers<[1], [0], [0], [1], [0, 0, 1, 1], [], []>} : vector<64x32xf32>, vector<32x4xf32>, vector<64x4xf32> -> vector<64x4xf32>
    %c0_13 = arith.constant 0 : index
    %c0_14 = arith.constant 0 : index
    %9 = vector.load %arg7[%c0_13, %c0_14] : memref<64x4xf32, #tpu.memory_space<vmem>>, vector<64x4xf32>
    tpu.vector_store %arg7[%c0_13, %c0_14], %8 {strides = array<i32>} : memref<64x4xf32, #tpu.memory_space<vmem>>, vector<64x4xf32>,
    return
  }
  func.func @transform_0(%arg0: i32) -> (i32, i32) {
    %c0_i32 = arith.constant 0 : i32
    %c0_i32_0 = arith.constant 0 : i32
    return %arg0, %c0_i32 : i32, i32
  }
  func.func @transform_1(%arg0: i32) -> (i32, i32) {
    %c0_i32 = arith.constant 0 : i32
    %c0_i32_0 = arith.constant 0 : i32
    %c0_i32_1 = arith.constant 0 : i32
    return %c0_i32, %c0_i32_0 : i32, i32
  }
  func.func @transform_2(%arg0: i32) -> (i32, i32) {
    %c0_i32 = arith.constant 0 : i32
    %c0_i32_0 = arith.constant 0 : i32
    %c0_i32_1 = arith.constant 0 : i32
    return %c0_i32, %c0_i32_0 : i32, i32
  }
  func.func @transform_3(%arg0: i32) -> (i32, i32) {
    %c0_i32 = arith.constant 0 : i32
    %c0_i32_0 = arith.constant 0 : i32
    %c0_i32_1 = arith.constant 0 : i32
    return %c0_i32, %c0_i32_0 : i32, i32
  }
  func.func @transform_4(%arg0: i32) -> (i32, i32) {
    %c0_i32 = arith.constant 0 : i32
    %c0_i32_0 = arith.constant 0 : i32
    return %arg0, %c0_i32 : i32, i32
  }
  func.func @transform_5(%arg0: i32) -> (i32, i32) {
    %c0_i32 = arith.constant 0 : i32
    %c0_i32_0 = arith.constant 0 : i32
    return %arg0, %c0_i32 : i32, i32
  }
  func.func @transform_6(%arg0: i32) -> (i32, i32) {
    %c0_i32 = arith.constant 0 : i32
    %c0_i32_0 = arith.constant 0 : i32
    return %arg0, %c0_i32 : i32, i32
  }
}

</mosaic_0001>

<llo_original>
// kernel: tpu_custom_call.1
$region0: #{tpu_custom_call.1}
  #allocation0 [shape = 'u32[]', space=smem, size = 0x4, offset = 0x4, fixed_abs, tag = 'smem constant byte address 0x4 - core index']
  #allocation1 [shape = 'u32[144,128]{1,0:T(1,128)}', space=vmem, size = 0x12000, scoped, tag = 'internal scratch']
  %s0 = inlined_call_operand.vmem [shape: f32[64,32], index: 0, kind: input, shape index: {}]
  %s1 = inlined_call_operand.vmem [shape: f32[32,32], index: 1, kind: input, shape index: {}]
  %s2 = inlined_call_operand.vmem [shape: f32[32,4], index: 2, kind: input, shape index: {}]
  %s3 = inlined_call_operand.vmem [shape: f32[32,4], index: 3, kind: input, shape index: {}]
  %s4 = inlined_call_operand.vmem [shape: f32[64,32], index: 4, kind: output, shape index: {0}]
  %s5 = inlined_call_operand.vmem [shape: f32[64,4], index: 5, kind: output, shape index: {1}]
  %s6 = inlined_call_operand.vmem [shape: f32[64,4], index: 6, kind: output, shape index: {2}]
  %7 = xla_tuple %s4, %s5, %s6
  %s8 = sld [smem:[#allocation0]]
  $region42: #{tpu_custom_call.1} parent=0
    _
  %s10 = ssub.s32 1, %s8
  %s11 = scalar_select 0, %s10, %s8
  // Predicated region
  $region2: #{tpu_custom_call.1} parent=0 // pred_check
    _
  $region3: #{tpu_custom_call.1} parent=0 // pred_check_branch
    %13 = sbr.rel (0) target = $region5
  $region4: #{tpu_custom_call.1} parent=0 // pred_region
    _
  $region5: #{tpu_custom_call.1} parent=0 // pred_fallthru
    _
  // Predicated region
  $region6: #{tpu_custom_call.1} parent=0 // pred_check
    _
  $region7: #{tpu_custom_call.1} parent=0 // pred_check_branch
    %15 = sbr.rel (0) target = $region9
  $region8: #{tpu_custom_call.1} parent=0 // pred_region
    _
  $region9: #{tpu_custom_call.1} parent=0 // pred_fallthru
    _
  // Predicated region
  $region10: #{tpu_custom_call.1} parent=0 // pred_check
    _
  $region11: #{tpu_custom_call.1} parent=0 // pred_check_branch
    %17 = sbr.rel (0) target = $region13
  $region12: #{tpu_custom_call.1} parent=0 // pred_region
    _
  $region13: #{tpu_custom_call.1} parent=0 // pred_fallthru
    _
  // Predicated region
  $region14: #{tpu_custom_call.1} parent=0 // pred_check
    _
  $region15: #{tpu_custom_call.1} parent=0 // pred_check_branch
    %19 = sbr.rel (0) target = $region17
  $region16: #{tpu_custom_call.1} parent=0 // pred_region
    _
  $region17: #{tpu_custom_call.1} parent=0 // pred_fallthru
    _
  %v20 = vld [vmem:[%s0] sm:$0xff]
  %v21 = vld [vmem:[%s0 + $0x8] sm:$0xff]
  %v22 = vld [vmem:[%s0 + $0x10] sm:$0xff]
  %v23 = vld [vmem:[%s0 + $0x18] sm:$0xff]
  %v24 = vld [vmem:[%s0 + $0x20] sm:$0xff]
  %v25 = vld [vmem:[%s0 + $0x28] sm:$0xff]
  %v26 = vld [vmem:[%s0 + $0x30] sm:$0xff]
  %v27 = vld [vmem:[%s0 + $0x38] sm:$0xff]
  %v28 = vld [vmem:[%s1] sm:$0xff]
  %v29 = vld [vmem:[%s1 + $0x8] sm:$0xff]
  %v30 = vld [vmem:[%s1 + $0x10] sm:$0xff]
  %v31 = vld [vmem:[%s1 + $0x18] sm:$0xff]
  %vm32 = vcmask 261120
  %v34 = vsel %vm32, %v20, 0
  %v37 = vsel %vm32, %v21, 0
  %v40 = vsel %vm32, %v22, 0
  %v43 = vsel %vm32, %v23, 0
  %v46 = vsel %vm32, %v24, 0
  %v49 = vsel %vm32, %v25, 0
  %v52 = vsel %vm32, %v26, 0
  %v55 = vsel %vm32, %v27, 0
  %57 = vmatprep.subr.mxu0 0.0
  %58 = vmatpush1.msra.mxu0 %v28
  %59 = vmatprep.subr.mxu0 0.0
  %60 = vmatpush1.msra.mxu0 %v29
  %61 = vmatprep.subr.mxu0 0.0
  %62 = vmatpush1.msra.mxu0 %v30
  %63 = vmatprep.subr.mxu0 0.0
  %64 = vmatpush1.msra.mxu0 %v31
  %65 = vmatprep.subr.mxu0 0.0
  %66 = vmatpush1.msra.mxu0 0.0
  %67 = vmatprep.subr.mxu0 0.0
  %68 = vmatpush1.msra.mxu0 0.0
  %69 = vmatprep.subr.mxu0 0.0
  %70 = vmatpush1.msra.mxu0 0.0
  %71 = vmatprep.subr.mxu0 0.0
  %72 = vmatpush1.msra.mxu0 0.0
  %73 = vmatprep.subr.mxu0 0.0
  %74 = vmatpush1.msra.mxu0 0.0
  %75 = vmatprep.subr.mxu0 0.0
  %76 = vmatpush1.msra.mxu0 0.0
  %77 = vmatprep.subr.mxu0 0.0
  %78 = vmatpush1.msra.mxu0 0.0
  %79 = vmatprep.subr.mxu0 0.0
  %80 = vmatpush1.msra.mxu0 0.0
  %81 = vmatprep.subr.mxu0 0.0
  %82 = vmatpush1.msra.mxu0 0.0
  %83 = vmatprep.subr.mxu0 0.0
  %84 = vmatpush1.msra.mxu0 0.0
  %85 = vmatprep.subr.mxu0 0.0
  %86 = vmatpush1.msra.mxu0 0.0
  %87 = vmatprep.subr.mxu0 0.0
  %88 = vmatpush1.msra.mxu0 0.0
  %89 = vmatprep.subr.mxu0 0.0
  %90 = vmatpush1.msra.mxu0 0.0
  %91 = vmatprep.subr.mxu0 0.0
  %92 = vmatpush1.msra.mxu0 0.0
  %93 = vmatprep.subr.mxu0 0.0
  %94 = vmatpush1.msra.mxu0 0.0
  %95 = vmatprep.subr.mxu0 0.0
  %96 = vmatpush1.msra.mxu0 0.0
  %97 = vmatprep.subr.mxu0 0.0
  %98 = vmatpush1.msra.mxu0 0.0
  %99 = vmatprep.subr.mxu0 0.0
  %100 = vmatpush1.msra.mxu0 0.0
  %101 = vmatprep.subr.mxu0 0.0
  %102 = vmatpush1.msra.mxu0 0.0
  %103 = vmatprep.subr.mxu0 0.0
  %104 = vmatpush1.msra.mxu0 0.0
  %105 = vmatprep.subr.mxu0 0.0
  %106 = vmatpush1.msra.mxu0 0.0
  %107 = vmatprep.subr.mxu0 0.0
  %108 = vmatpush1.msra.mxu0 0.0
  %109 = vmatprep.subr.mxu0 0.0
  %110 = vmatpush1.msra.mxu0 0.0
  %111 = vmatprep.subr.mxu0 0.0
  %112 = vmatpush1.msra.mxu0 0.0
  %113 = vmatprep.subr.mxu0 0.0
  %114 = vmatpush1.msra.mxu0 0.0
  %115 = vmatprep.subr.mxu0 0.0
  %116 = vmatpush1.msra.mxu0 0.0
  %117 = vmatprep.subr.mxu0 0.0
  %118 = vmatpush1.msra.mxu0 0.0
  %119 = vmatprep.subr.mxu0 0.0
  %120 = vmatpush1.msra.mxu0 0.0
  %121 = vmatprep.mubr.f32.mxu0 0.0
  %122 = vmatmul.mubr.f32.gmra.mrb[0].mxu0 %v34
  %v123 = vpop.f32.mrb[0].mxu0
  %v124 = vadd.f32 0.0, %v123
  %v125 = vpop.f32.mrb[0].mxu0
  %126 = vmatprep.mubr.f32.mxu0 0.0
  %127 = vmatmul.mubr.f32.gmra.mrb[0].mxu0 %v37
  %v128 = vpop.f32.mrb[0].mxu0
  %v129 = vadd.f32 0.0, %v128
  %v130 = vpop.f32.mrb[0].mxu0
  %131 = vmatprep.mubr.f32.mxu0 0.0
  %132 = vmatmul.mubr.f32.gmra.mrb[0].mxu0 %v40
  %v133 = vpop.f32.mrb[0].mxu0
  %v134 = vadd.f32 0.0, %v133
  %v135 = vpop.f32.mrb[0].mxu0
  %136 = vmatprep.mubr.f32.mxu0 0.0
  %137 = vmatmul.mubr.f32.gmra.mrb[0].mxu0 %v43
  %v138 = vpop.f32.mrb[0].mxu0
  %v139 = vadd.f32 0.0, %v138
  %v140 = vpop.f32.mrb[0].mxu0
  %141 = vmatprep.mubr.f32.mxu0 0.0
  %142 = vmatmul.mubr.f32.gmra.mrb[0].mxu0 %v46
  %v143 = vpop.f32.mrb[0].mxu0
  %v144 = vadd.f32 0.0, %v143
  %v145 = vpop.f32.mrb[0].mxu0
  %146 = vmatprep.mubr.f32.mxu0 0.0
  %147 = vmatmul.mubr.f32.gmra.mrb[0].mxu0 %v49
  %v148 = vpop.f32.mrb[0].mxu0
  %v149 = vadd.f32 0.0, %v148
  %v150 = vpop.f32.mrb[0].mxu0
  %151 = vmatprep.mubr.f32.mxu0 0.0
  %152 = vmatmul.mubr.f32.gmra.mrb[0].mxu0 %v52
  %v153 = vpop.f32.mrb[0].mxu0
  %v154 = vadd.f32 0.0, %v153
  %v155 = vpop.f32.mrb[0].mxu0
  %156 = vmatprep.mubr.f32.mxu0 0.0
  %157 = vmatmul.mubr.f32.gmra.mrb[0].mxu0 %v55
  %v158 = vpop.f32.mrb[0].mxu0
  %v159 = vadd.f32 0.0, %v158
  %v160 = vpop.f32.mrb[0].mxu0
  %161 = vdwg.mxu0
  %162 = vst.msk [vmem:[%s4] sm:$0xff] %vm32, %v124
  %163 = vst.msk [vmem:[%s4 + $0x8] sm:$0xff] %vm32, %v129
  %164 = vst.msk [vmem:[%s4 + $0x10] sm:$0xff] %vm32, %v134
  %165 = vst.msk [vmem:[%s4 + $0x18] sm:$0xff] %vm32, %v139
  %166 = vst.msk [vmem:[%s4 + $0x20] sm:$0xff] %vm32, %v144
  %167 = vst.msk [vmem:[%s4 + $0x28] sm:$0xff] %vm32, %v149
  %168 = vst.msk [vmem:[%s4 + $0x30] sm:$0xff] %vm32, %v154
  %169 = vst.msk [vmem:[%s4 + $0x38] sm:$0xff] %vm32, %v159
  %v170 = vld [vmem:[%s2] sm:$0xff]
  %v171 = vld [vmem:[%s2 + $0x8] sm:$0xff]
  %v172 = vld [vmem:[%s2 + $0x10] sm:$0xff]
  %v173 = vld [vmem:[%s2 + $0x18] sm:$0xff]
  %v175 = vsel %vm32, %v124, 0
  %v178 = vsel %vm32, %v129, 0
  %v181 = vsel %vm32, %v134, 0
  %v184 = vsel %vm32, %v139, 0
  %v187 = vsel %vm32, %v144, 0
  %v190 = vsel %vm32, %v149, 0
  %v193 = vsel %vm32, %v154, 0
  %v196 = vsel %vm32, %v159, 0
  %198 = vmatprep.subr.mxu0 0.0
  %199 = vmatpush1.msra.mxu0 %v170
  %200 = vmatprep.subr.mxu0 0.0
  %201 = vmatpush1.msra.mxu0 %v171
  %202 = vmatprep.subr.mxu0 0.0
  %203 = vmatpush1.msra.mxu0 %v172
  %204 = vmatprep.subr.mxu0 0.0
  %205 = vmatpush1.msra.mxu0 %v173
  %206 = vmatprep.subr.mxu0 0.0
  %207 = vmatpush1.msra.mxu0 0.0
  %208 = vmatprep.subr.mxu0 0.0
  %209 = vmatpush1.msra.mxu0 0.0
  %210 = vmatprep.subr.mxu0 0.0
  %211 = vmatpush1.msra.mxu0 0.0
  %212 = vmatprep.subr.mxu0 0.0
  %213 = vmatpush1.msra.mxu0 0.0
  %214 = vmatprep.subr.mxu0 0.0
  %215 = vmatpush1.msra.mxu0 0.0
  %216 = vmatprep.subr.mxu0 0.0
  %217 = vmatpush1.msra.mxu0 0.0
  %218 = vmatprep.subr.mxu0 0.0
  %219 = vmatpush1.msra.mxu0 0.0
  %220 = vmatprep.subr.mxu0 0.0
  %221 = vmatpush1.msra.mxu0 0.0
  %222 = vmatprep.subr.mxu0 0.0
  %223 = vmatpush1.msra.mxu0 0.0
  %224 = vmatprep.subr.mxu0 0.0
  %225 = vmatpush1.msra.mxu0 0.0
  %226 = vmatprep.subr.mxu0 0.0
  %227 = vmatpush1.msra.mxu0 0.0
  %228 = vmatprep.subr.mxu0 0.0
  %229 = vmatpush1.msra.mxu0 0.0
  %230 = vmatprep.subr.mxu0 0.0
  %231 = vmatpush1.msra.mxu0 0.0
  %232 = vmatprep.subr.mxu0 0.0
  %233 = vmatpush1.msra.mxu0 0.0
  %234 = vmatprep.subr.mxu0 0.0
  %235 = vmatpush1.msra.mxu0 0.0
  %236 = vmatprep.subr.mxu0 0.0
  %237 = vmatpush1.msra.mxu0 0.0
  %238 = vmatprep.subr.mxu0 0.0
  %239 = vmatpush1.msra.mxu0 0.0
  %240 = vmatprep.subr.mxu0 0.0
  %241 = vmatpush1.msra.mxu0 0.0
  %242 = vmatprep.subr.mxu0 0.0
  %243 = vmatpush1.msra.mxu0 0.0
  %244 = vmatprep.subr.mxu0 0.0
  %245 = vmatpush1.msra.mxu0 0.0
  %246 = vmatprep.subr.mxu0 0.0
  %247 = vmatpush1.msra.mxu0 0.0
  %248 = vmatprep.subr.mxu0 0.0
  %249 = vmatpush1.msra.mxu0 0.0
  %250 = vmatprep.subr.mxu0 0.0
  %251 = vmatpush1.msra.mxu0 0.0
  %252 = vmatprep.subr.mxu0 0.0
  %253 = vmatpush1.msra.mxu0 0.0
  %254 = vmatprep.subr.mxu0 0.0
  %255 = vmatpush1.msra.mxu0 0.0
  %256 = vmatprep.subr.mxu0 0.0
  %257 = vmatpush1.msra.mxu0 0.0
  %258 = vmatprep.subr.mxu0 0.0
  %259 = vmatpush1.msra.mxu0 0.0
  %260 = vmatprep.subr.mxu0 0.0
  %261 = vmatpush1.msra.mxu0 0.0
  %262 = vmatprep.mubr.f32.mxu0 0.0
  %263 = vmatmul.mubr.f32.gmra.mrb[0].mxu0 %v175
  %v264 = vpop.f32.mrb[0].mxu0
  %v265 = vadd.f32 0.0, %v264
  %v266 = vpop.f32.mrb[0].mxu0
  %267 = vmatprep.mubr.f32.mxu0 0.0
  %268 = vmatmul.mubr.f32.gmra.mrb[0].mxu0 %v178
  %v269 = vpop.f32.mrb[0].mxu0
  %v270 = vadd.f32 0.0, %v269
  %v271 = vpop.f32.mrb[0].mxu0
  %272 = vmatprep.mubr.f32.mxu0 0.0
  %273 = vmatmul.mubr.f32.gmra.mrb[0].mxu0 %v181
  %v274 = vpop.f32.mrb[0].mxu0
  %v275 = vadd.f32 0.0, %v274
  %v276 = vpop.f32.mrb[0].mxu0
  %277 = vmatprep.mubr.f32.mxu0 0.0
  %278 = vmatmul.mubr.f32.gmra.mrb[0].mxu0 %v184
  %v279 = vpop.f32.mrb[0].mxu0
  %v280 = vadd.f32 0.0, %v279
  %v281 = vpop.f32.mrb[0].mxu0
  %282 = vmatprep.mubr.f32.mxu0 0.0
  %283 = vmatmul.mubr.f32.gmra.mrb[0].mxu0 %v187
  %v284 = vpop.f32.mrb[0].mxu0
  %v285 = vadd.f32 0.0, %v284
  %v286 = vpop.f32.mrb[0].mxu0
  %287 = vmatprep.mubr.f32.mxu0 0.0
  %288 = vmatmul.mubr.f32.gmra.mrb[0].mxu0 %v190
  %v289 = vpop.f32.mrb[0].mxu0
  %v290 = vadd.f32 0.0, %v289
  %v291 = vpop.f32.mrb[0].mxu0
  %292 = vmatprep.mubr.f32.mxu0 0.0
  %293 = vmatmul.mubr.f32.gmra.mrb[0].mxu0 %v193
  %v294 = vpop.f32.mrb[0].mxu0
  %v295 = vadd.f32 0.0, %v294
  %v296 = vpop.f32.mrb[0].mxu0
  %297 = vmatprep.mubr.f32.mxu0 0.0
  %298 = vmatmul.mubr.f32.gmra.mrb[0].mxu0 %v196
  %v299 = vpop.f32.mrb[0].mxu0
  %v300 = vadd.f32 0.0, %v299
  %v301 = vpop.f32.mrb[0].mxu0
  %302 = vdwg.mxu0
  %vm303 = vcmask 31744
  %304 = vst.msk [vmem:[%s5] sm:$0xff] %vm303, %v265
  %305 = vst.msk [vmem:[%s5 + $0x8] sm:$0xff] %vm303, %v270
  %306 = vst.msk [vmem:[%s5 + $0x10] sm:$0xff] %vm303, %v275
  %307 = vst.msk [vmem:[%s5 + $0x18] sm:$0xff] %vm303, %v280
  %308 = vst.msk [vmem:[%s5 + $0x20] sm:$0xff] %vm303, %v285
  %309 = vst.msk [vmem:[%s5 + $0x28] sm:$0xff] %vm303, %v290
  %310 = vst.msk [vmem:[%s5 + $0x30] sm:$0xff] %vm303, %v295
  %311 = vst.msk [vmem:[%s5 + $0x38] sm:$0xff] %vm303, %v300
  %v312 = vld [vmem:[%s3] sm:$0xff]
  %v313 = vld [vmem:[%s3 + $0x8] sm:$0xff]
  %v314 = vld [vmem:[%s3 + $0x10] sm:$0xff]
  %v315 = vld [vmem:[%s3 + $0x18] sm:$0xff]
  %316 = vmatprep.subr.mxu0 0.0
  %317 = vmatpush1.msra.mxu0 %v312
  %318 = vmatprep.subr.mxu0 0.0
  %319 = vmatpush1.msra.mxu0 %v313
  %320 = vmatprep.subr.mxu0 0.0
  %321 = vmatpush1.msra.mxu0 %v314
  %322 = vmatprep.subr.mxu0 0.0
  %323 = vmatpush1.msra.mxu0 %v315
  %324 = vmatprep.subr.mxu0 0.0
  %325 = vmatpush1.msra.mxu0 0.0
  %326 = vmatprep.subr.mxu0 0.0
  %327 = vmatpush1.msra.mxu0 0.0
  %328 = vmatprep.subr.mxu0 0.0
  %329 = vmatpush1.msra.mxu0 0.0
  %330 = vmatprep.subr.mxu0 0.0
  %331 = vmatpush1.msra.mxu0 0.0
  %332 = vmatprep.subr.mxu0 0.0
  %333 = vmatpush1.msra.mxu0 0.0
  %334 = vmatprep.subr.mxu0 0.0
  %335 = vmatpush1.msra.mxu0 0.0
  %336 = vmatprep.subr.mxu0 0.0
  %337 = vmatpush1.msra.mxu0 0.0
  %338 = vmatprep.subr.mxu0 0.0
  %339 = vmatpush1.msra.mxu0 0.0
  %340 = vmatprep.subr.mxu0 0.0
  %341 = vmatpush1.msra.mxu0 0.0
  %342 = vmatprep.subr.mxu0 0.0
  %343 = vmatpush1.msra.mxu0 0.0
  %344 = vmatprep.subr.mxu0 0.0
  %345 = vmatpush1.msra.mxu0 0.0
  %346 = vmatprep.subr.mxu0 0.0
  %347 = vmatpush1.msra.mxu0 0.0
  %348 = vmatprep.subr.mxu0 0.0
  %349 = vmatpush1.msra.mxu0 0.0
  %350 = vmatprep.subr.mxu0 0.0
  %351 = vmatpush1.msra.mxu0 0.0
  %352 = vmatprep.subr.mxu0 0.0
  %353 = vmatpush1.msra.mxu0 0.0
  %354 = vmatprep.subr.mxu0 0.0
  %355 = vmatpush1.msra.mxu0 0.0
  %356 = vmatprep.subr.mxu0 0.0
  %357 = vmatpush1.msra.mxu0 0.0
  %358 = vmatprep.subr.mxu0 0.0
  %359 = vmatpush1.msra.mxu0 0.0
  %360 = vmatprep.subr.mxu0 0.0
  %361 = vmatpush1.msra.mxu0 0.0
  %362 = vmatprep.subr.mxu0 0.0
  %363 = vmatpush1.msra.mxu0 0.0
  %364 = vmatprep.subr.mxu0 0.0
  %365 = vmatpush1.msra.mxu0 0.0
  %366 = vmatprep.subr.mxu0 0.0
  %367 = vmatpush1.msra.mxu0 0.0
  %368 = vmatprep.subr.mxu0 0.0
  %369 = vmatpush1.msra.mxu0 0.0
  %370 = vmatprep.subr.mxu0 0.0
  %371 = vmatpush1.msra.mxu0 0.0
  %372 = vmatprep.subr.mxu0 0.0
  %373 = vmatpush1.msra.mxu0 0.0
  %374 = vmatprep.subr.mxu0 0.0
  %375 = vmatpush1.msra.mxu0 0.0
  %376 = vmatprep.subr.mxu0 0.0
  %377 = vmatpush1.msra.mxu0 0.0
  %378 = vmatprep.subr.mxu0 0.0
  %379 = vmatpush1.msra.mxu0 0.0
  %380 = vmatprep.mubr.f32.mxu0 0.0
  %381 = vmatmul.mubr.f32.gmra.mrb[0].mxu0 %v175
  %v382 = vpop.f32.mrb[0].mxu0
  %v383 = vadd.f32 0.0, %v382
  %v384 = vpop.f32.mrb[0].mxu0
  %385 = vmatprep.mubr.f32.mxu0 0.0
  %386 = vmatmul.mubr.f32.gmra.mrb[0].mxu0 %v178
  %v387 = vpop.f32.mrb[0].mxu0
  %v388 = vadd.f32 0.0, %v387
  %v389 = vpop.f32.mrb[0].mxu0
  %390 = vmatprep.mubr.f32.mxu0 0.0
  %391 = vmatmul.mubr.f32.gmra.mrb[0].mxu0 %v181
  %v392 = vpop.f32.mrb[0].mxu0
  %v393 = vadd.f32 0.0, %v392
  %v394 = vpop.f32.mrb[0].mxu0
  %395 = vmatprep.mubr.f32.mxu0 0.0
  %396 = vmatmul.mubr.f32.gmra.mrb[0].mxu0 %v184
  %v397 = vpop.f32.mrb[0].mxu0
  %v398 = vadd.f32 0.0, %v397
  %v399 = vpop.f32.mrb[0].mxu0
  %400 = vmatprep.mubr.f32.mxu0 0.0
  %401 = vmatmul.mubr.f32.gmra.mrb[0].mxu0 %v187
  %v402 = vpop.f32.mrb[0].mxu0
  %v403 = vadd.f32 0.0, %v402
  %v404 = vpop.f32.mrb[0].mxu0
  %405 = vmatprep.mubr.f32.mxu0 0.0
  %406 = vmatmul.mubr.f32.gmra.mrb[0].mxu0 %v190
  %v407 = vpop.f32.mrb[0].mxu0
  %v408 = vadd.f32 0.0, %v407
  %v409 = vpop.f32.mrb[0].mxu0
  %410 = vmatprep.mubr.f32.mxu0 0.0
  %411 = vmatmul.mubr.f32.gmra.mrb[0].mxu0 %v193
  %v412 = vpop.f32.mrb[0].mxu0
  %v413 = vadd.f32 0.0, %v412
  %v414 = vpop.f32.mrb[0].mxu0
  %415 = vmatprep.mubr.f32.mxu0 0.0
  %416 = vmatmul.mubr.f32.gmra.mrb[0].mxu0 %v196
  %v417 = vpop.f32.mrb[0].mxu0
  %v418 = vadd.f32 0.0, %v417
  %v419 = vpop.f32.mrb[0].mxu0
  %420 = vdwg.mxu0
  %421 = vst.msk [vmem:[%s6] sm:$0xff] %vm303, %v383
  %422 = vst.msk [vmem:[%s6 + $0x8] sm:$0xff] %vm303, %v388
  %423 = vst.msk [vmem:[%s6 + $0x10] sm:$0xff] %vm303, %v393
  %424 = vst.msk [vmem:[%s6 + $0x18] sm:$0xff] %vm303, %v398
  %425 = vst.msk [vmem:[%s6 + $0x20] sm:$0xff] %vm303, %v403
  %426 = vst.msk [vmem:[%s6 + $0x28] sm:$0xff] %vm303, %v408
  %427 = vst.msk [vmem:[%s6 + $0x30] sm:$0xff] %vm303, %v413
  %428 = vst.msk [vmem:[%s6 + $0x38] sm:$0xff] %vm303, %v418
  // Predicated region
  $region18: #{tpu_custom_call.1} parent=0 // pred_check
    _
  $region19: #{tpu_custom_call.1} parent=0 // pred_check_branch
    %430 = sbr.rel (0) target = $region21
  $region20: #{tpu_custom_call.1} parent=0 // pred_region
    _
  $region21: #{tpu_custom_call.1} parent=0 // pred_fallthru
    _
  // Predicated region
  $region22: #{tpu_custom_call.1} parent=0 // pred_check
    _
  $region23: #{tpu_custom_call.1} parent=0 // pred_check_branch
    %432 = sbr.rel (0) target = $region25
  $region24: #{tpu_custom_call.1} parent=0 // pred_region
    _
  $region25: #{tpu_custom_call.1} parent=0 // pred_fallthru
    _
  // Predicated region
  $region26: #{tpu_custom_call.1} parent=0 // pred_check
    _
  $region27: #{tpu_custom_call.1} parent=0 // pred_check_branch
    %434 = sbr.rel (0) target = $region29
  $region28: #{tpu_custom_call.1} parent=0 // pred_region
    _
  $region29: #{tpu_custom_call.1} parent=0 // pred_fallthru
    _
  // Predicated region
  $region30: #{tpu_custom_call.1} parent=0 // pred_check
    _
  $region31: #{tpu_custom_call.1} parent=0 // pred_check_branch
    %436 = sbr.rel (0) target = $region33
  $region32: #{tpu_custom_call.1} parent=0 // pred_region
    _
  $region33: #{tpu_custom_call.1} parent=0 // pred_fallthru
    _
  // Predicated region
  $region34: #{tpu_custom_call.1} parent=0 // pred_check
    _
  $region35: #{tpu_custom_call.1} parent=0 // pred_check_branch
    %438 = sbr.rel (0) target = $region37
  $region36: #{tpu_custom_call.1} parent=0 // pred_region
    _
  $region37: #{tpu_custom_call.1} parent=0 // pred_fallthru
    _
  // Predicated region
  $region38: #{tpu_custom_call.1} parent=0 // pred_check
    _
  $region39: #{tpu_custom_call.1} parent=0 // pred_check_branch
    %440 = sbr.rel (0) target = $region41
  $region40: #{tpu_custom_call.1} parent=0 // pred_region
    _
  $region41: #{tpu_custom_call.1} parent=0 // pred_fallthru
    _

</llo_original>
